<compile_context>
chip_gen: v5e
topology: v5e:2x2
jax: 0.10.0
libtpu: 0.0.40
codegen_flags: <defaults>
</compile_context>

<pallas_src>
import jax
import jax.numpy as jnp
from jax.experimental import pallas as pl
from jax.experimental.pallas import tpu as pltpu

_LANE = 128     # vreg lane width
_SUBLANE = 8    # vreg sublane width


def _round_up(x: int, m: int) -> int:
    return ((x + m - 1) // m) * m


def _tpu_hw():
    """(vmem_capacity_bytes, tensorcores_per_chip) with conservative fallbacks."""
    vmem = 64 << 20
    n_tc = 0
    try:
        info = pltpu.get_tpu_info()
        vmem = int(getattr(info, "vmem_capacity_bytes", vmem))
        for attr in ("tensorcore_count", "num_tensorcores", "num_cores", "core_count"):
            v = getattr(info, attr, None)
            if isinstance(v, int) and v > 0:
                n_tc = v
                break
    except Exception:
        pass
    if n_tc <= 0:
        # Heuristic: 64 MiB-per-TC chips (v7x) carry 2 TensorCores; 128 MiB
        # chips (v5e/v6e) carry 1.
        n_tc = 2 if vmem <= (64 << 20) else 1
    return vmem, min(max(n_tc, 1), 2)


def _choose_batch_tile(batch: int, requested: int, n_tc: int):
    """Batch tile: multiple of 8, capped by the (8-rounded) batch size.

    Splitting into >= n_tc tiles is only done on multi-TensorCore chips —
    on 1-TC v5e/v6e the grid is a serial loop and splitting just halves the
    MXU M dim and doubles the ~0.35us/step pipeline overhead."""
    batch = max(int(batch), 1)
    tile = max(8, min(int(requested), _round_up(batch, 8)))
    tile = (tile // 8) * 8
    if n_tc >= 2:
        per_core = _round_up(-(-batch // n_tc), 8)   # ceil(batch / n_tc), 8-aligned
        if per_core < tile:
            tile = max(8, per_core)
    b_pad = _round_up(batch, tile)
    return tile, b_pad


def _make_mlp_kernel(num_layers: int):
    """Fused-MLP kernel. Ref order: x, w0, b0, w1, b1, ..., out."""

    def kernel(*refs):
        x_ref = refs[0]
        out_ref = refs[-1]
        wb = refs[1:-1]

        # Cast to bf16 in-kernel (saves a separate XLA convert pass over x).
        h = x_ref[...].astype(jnp.bfloat16)          # [tile, d_in_pad]
        for i in range(num_layers):
            w = wb[2 * i][...]                        # bf16 [k, n]
            b = wb[2 * i + 1][...]                    # f32  [1, n]
            acc = jnp.dot(h, w, preferred_element_type=jnp.float32) + b
            if i < num_layers - 1:
                # act = nn.ReLU (between layers only, not after the last)
                h = jnp.maximum(acc, 0.0).astype(jnp.bfloat16)
            else:
                h = acc
        out_ref[...] = h.astype(out_ref.dtype)

    return kernel


def prepare_network_params(weights, biases):
    """One-time parameter prep (hoisted out of the forward).

    weights: list of [d_in, d_out] f32 (already transposed from PyTorch [out, in])
    biases:  list of [1, d_out] f32

    Padding policy:
      * input K dim      -> multiple of 8 (sublane) only, so x needs no 128-pad
      * hidden dims      -> multiple of 128 (lane-dense activation chain / MXU)
      * output N dim     -> unpadded (narrow masked store; output bytes stay tiny)
    """
    assert len(weights) == len(biases) >= 1
    dims = [weights[0].shape[0]] + [w.shape[1] for w in weights]
    pdims = [_round_up(dims[0], _SUBLANE)]
    for d in dims[1:-1]:
        pdims.append(_round_up(d, _LANE))
    pdims.append(dims[-1])

    w_p, b_p = [], []
    for i, (w, b) in enumerate(zip(weights, biases)):
        w_p.append(
            jnp.pad(w, ((0, pdims[i] - w.shape[0]), (0, pdims[i + 1] - w.shape[1])))
            .astype(jnp.bfloat16)
        )
        b_p.append(
            jnp.pad(b, ((0, 0), (0, pdims[i + 1] - b.shape[1]))).astype(jnp.float32)
        )
    return {"weights": w_p, "biases": b_p, "dims": dims, "pdims": pdims}


def network_forward(x, params, *, batch_tile=None):
    """Fused Pallas forward for Network. x: [B, input_dim] float32."""
    assert x.ndim == 2
    B, D = x.shape
    w_p, b_p = params["weights"], params["biases"]
    dims, pdims = params["dims"], params["pdims"]
    assert D == dims[0], (D, dims[0])
    num_layers = len(w_p)
    out_dim = dims[-1]
    d_in_pad = pdims[0]

    # ---- chip-aware budgets -------------------------------------------------
    vmem_cap, n_tc = _tpu_hw()
    # Leave headroom below physical VMEM for compiler-internal scratch.
    vmem_budget = (56 << 20) if vmem_cap <= (64 << 20) else (100 << 20)
    if batch_tile is None:
        batch_tile = 512 if vmem_cap <= (64 << 20) else 2048

    w_bytes = sum(w.size * 2 for w in w_p) + sum(b.size * 4 for b in b_p)

    def est_vmem(tile):
        e = 2 * w_bytes                      # weights x 2 buffers (conservative)
        e += 2 * tile * d_in_pad * 4         # x tile (f32, double-buffered)
        e += 2 * tile * out_dim * 4          # out tile (f32, double-buffered)
        e += 4 * tile * max(pdims) * 4       # live activation chain (f32 worst case)
        return e

    tile, b_pad = _choose_batch_tile(B, batch_tile, n_tc)
    # Honest accounting: shrink the tile until it fits instead of relying on spills.
    while tile > 8 and est_vmem(tile) > vmem_budget:
        tile = max(8, ((tile // 2) // 8) * 8)
    b_pad = _round_up(max(B, 1), tile)
    grid = (b_pad // tile,)

    vmem_limit = int(min(vmem_budget, max(32 << 20, 2 * est_vmem(tile))))

    # ---- x: stream at true width; pad only when actually needed --------------
    # TODO(synk): handle a ragged last batch tile with pl.when instead of padding B.
    if (b_pad != B) or (d_in_pad != D):
        x_in = jnp.pad(x, ((0, b_pad - B), (0, d_in_pad - D)))
    else:
        x_in = x

    operands = [x_in]
    for w, b in zip(w_p, b_p):
        operands.append(w)
        operands.append(b)

    kernel = _make_mlp_kernel(num_layers)

    def build(single_buffer_weights):
        in_specs = [pl.BlockSpec((tile, d_in_pad), lambda i: (i, 0))]
        for w, b in zip(w_p, b_p):
            if single_buffer_weights:
                # Grid-invariant -> single-buffer to halve resident weight VMEM.
                in_specs.append(
                    pl.BlockSpec(w.shape, lambda i: (0, 0), pipeline_mode=pl.Buffered(1)))
                in_specs.append(
                    pl.BlockSpec(b.shape, lambda i: (0, 0), pipeline_mode=pl.Buffered(1)))
            else:
                in_specs.append(pl.BlockSpec(w.shape, lambda i: (0, 0)))
                in_specs.append(pl.BlockSpec(b.shape, lambda i: (0, 0)))
        out_spec = pl.BlockSpec((tile, out_dim), lambda i: (i, 0))
        return pl.pallas_call(
            kernel,
            out_shape=jax.ShapeDtypeStruct((b_pad, out_dim), jnp.float32),
            grid_spec=pltpu.PrefetchScalarGridSpec(
                num_scalar_prefetch=0,
                grid=grid,
                in_specs=in_specs,
                out_specs=out_spec,
            ),
            compiler_params=pltpu.CompilerParams(
                dimension_semantics=("parallel",),
                vmem_limit_bytes=vmem_limit,
            ),
        )

    try:
        out = build(single_buffer_weights=True)(*operands)
    except Exception:
        # pipeline_mode=pl.Buffered(1) not supported by this jax/libtpu combo;
        # fall back to default double-buffered (still DMA'd only once) weights.
        out = build(single_buffer_weights=False)(*operands)

    return out if b_pad == B else out[:B]


def init_network_params(key, input_dim, hidden_sizes, output_dim):
    """PyTorch-Linear-style uniform init; weights returned as [d_in, d_out]."""
    dims = [input_dim] + list(hidden_sizes) + [output_dim]
    weights, biases = [], []
    for d_in, d_out in zip(dims[:-1], dims[1:]):
        key, kw, kb = jax.random.split(key, 3)
        bound = 1.0 / jnp.sqrt(float(d_in))
        weights.append(jax.random.uniform(kw, (d_in, d_out), jnp.float32, -bound, bound))
        biases.append(jax.random.uniform(kb, (1, d_out), jnp.float32, -bound, bound))
    return weights, biases


def network_reference(x, weights, biases):
    """Pure-JAX f32 reference matching the PyTorch forward."""
    h = x
    n = len(weights)
    for i, (w, b) in enumerate(zip(weights, biases)):
        h = h @ w + b
        if i < n - 1:
            h = jnp.maximum(h, 0.0)
    return h


if __name__ == "__main__":
    # Small shapes consistent with Network(input_dim, hidden_sizes, output_dim, nn.ReLU).
    # Non-multiples of 128 chosen on purpose to exercise the padding policy.
    B = 32
    input_dim = 24
    hidden_sizes = [48, 40]
    output_dim = 12

    key = jax.random.PRNGKey(0)
    key, kx = jax.random.split(key)
    x = jax.random.normal(kx, (B, input_dim), jnp.float32)

    weights, biases = init_network_params(key, input_dim, hidden_sizes, output_dim)

    params = prepare_network_params(weights, biases)   # one-time pad + bf16 cast
    out = network_forward(x, params)
    out = jax.block_until_ready(out)

    ref = network_reference(x, weights, biases)
    assert out.shape == (B, output_dim), out.shape
    # bf16 MXU operands vs f32 reference -> loosened tolerance.
    assert jnp.allclose(out, ref, atol=3e-2, rtol=3e-2), float(jnp.abs(out - ref).max())

    print("KERNEL_OK")
</pallas_src>

<mosaic_0001>
module attributes {stable_mosaic.version = 11 : i64} {
  func.func @kernel(%arg0: i32, %arg1: memref<16x24xf32, #tpu.memory_space<vmem>>, %arg2: memref<24x128xbf16, #tpu.memory_space<vmem>>, %arg3: memref<1x128xf32, #tpu.memory_space<vmem>>, %arg4: memref<128x128xbf16, #tpu.memory_space<vmem>>, %arg5: memref<1x128xf32, #tpu.memory_space<vmem>>, %arg6: memref<128x12xbf16, #tpu.memory_space<vmem>>, %arg7: memref<1x12xf32, #tpu.memory_space<vmem>>, %arg8: memref<16x12xf32, #tpu.memory_space<vmem>>) attributes {dimension_semantics = [#tpu.dimension_semantics<parallel>], iteration_bounds = array<i64: 2>, scalar_prefetch = 0 : i64, scratch_operands = 0 : i64, tpu.core_type = #tpu.core_type<tc>, window_params = [{transform_indices = @transform_0, window_bounds = array<i64: 16, 24>}, {pipeline_mode = #tpu.pipeline_mode<synchronous>, transform_indices = @transform_1, window_bounds = array<i64: 24, 128>}, {pipeline_mode = #tpu.pipeline_mode<synchronous>, transform_indices = @transform_2, window_bounds = array<i64: 1, 128>}, {pipeline_mode = #tpu.pipeline_mode<synchronous>, transform_indices = @transform_3, window_bounds = array<i64: 128, 128>}, {pipeline_mode = #tpu.pipeline_mode<synchronous>, transform_indices = @transform_4, window_bounds = array<i64: 1, 128>}, {pipeline_mode = #tpu.pipeline_mode<synchronous>, transform_indices = @transform_5, window_bounds = array<i64: 128, 12>}, {pipeline_mode = #tpu.pipeline_mode<synchronous>, transform_indices = @transform_6, window_bounds = array<i64: 1, 12>}, {transform_indices = @transform_7, window_bounds = array<i64: 16, 12>}]} {
    %c0 = arith.constant 0 : index
    %c0_0 = arith.constant 0 : index
    %0 = vector.load %arg1[%c0, %c0_0] : memref<16x24xf32, #tpu.memory_space<vmem>>, vector<16x24xf32>
    %1 = arith.truncf %0 : vector<16x24xf32> to vector<16x24xbf16>
    %c0_1 = arith.constant 0 : index
    %c0_2 = arith.constant 0 : index
    %2 = vector.load %arg2[%c0_1, %c0_2] : memref<24x128xbf16, #tpu.memory_space<vmem>>, vector<24x128xbf16>
    %c0_3 = arith.constant 0 : index
    %c0_4 = arith.constant 0 : index
    %3 = vector.load %arg3[%c0_3, %c0_4] : memref<1x128xf32, #tpu.memory_space<vmem>>, vector<1x128xf32>
    %cst = arith.constant dense<0.000000e+00> : vector<16x128xf32>
    %4 = tpu.matmul %1, %2, %cst {dimension_numbers = #tpu.dot_dimension_numbers<[1], [0], [0], [1], [0, 0, 1, 1], [], []>} : vector<16x24xbf16>, vector<24x128xbf16>, vector<16x128xf32> -> vector<16x128xf32>
    %5 = vector.broadcast %3 : vector<1x128xf32> to vector<16x128xf32>
    %6 = arith.addf %4, %5 : vector<16x128xf32>
    %cst_5 = arith.constant 0.000000e+00 : f32
    %7 = vector.broadcast %cst_5 : f32 to vector<16x128xf32>
    %8 = arith.maximumf %6, %7 : vector<16x128xf32>
    %9 = arith.truncf %8 : vector<16x128xf32> to vector<16x128xbf16>
    %c0_6 = arith.constant 0 : index
    %c0_7 = arith.constant 0 : index
    %10 = vector.load %arg4[%c0_6, %c0_7] : memref<128x128xbf16, #tpu.memory_space<vmem>>, vector<128x128xbf16>
    %c0_8 = arith.constant 0 : index
    %c0_9 = arith.constant 0 : index
    %11 = vector.load %arg5[%c0_8, %c0_9] : memref<1x128xf32, #tpu.memory_space<vmem>>, vector<1x128xf32>
    %cst_10 = arith.constant dense<0.000000e+00> : vector<16x128xf32>
    %12 = tpu.matmul %9, %10, %cst_10 {dimension_numbers = #tpu.dot_dimension_numbers<[1], [0], [0], [1], [0, 0, 1, 1], [], []>} : vector<16x128xbf16>, vector<128x128xbf16>, vector<16x128xf32> -> vector<16x128xf32>
    %13 = vector.broadcast %11 : vector<1x128xf32> to vector<16x128xf32>
    %14 = arith.addf %12, %13 : vector<16x128xf32>
    %cst_11 = arith.constant 0.000000e+00 : f32
    %15 = vector.broadcast %cst_11 : f32 to vector<16x128xf32>
    %16 = arith.maximumf %14, %15 : vector<16x128xf32>
    %17 = arith.truncf %16 : vector<16x128xf32> to vector<16x128xbf16>
    %c0_12 = arith.constant 0 : index
    %c0_13 = arith.constant 0 : index
    %18 = vector.load %arg6[%c0_12, %c0_13] : memref<128x12xbf16, #tpu.memory_space<vmem>>, vector<128x12xbf16>
    %c0_14 = arith.constant 0 : index
    %c0_15 = arith.constant 0 : index
    %19 = vector.load %arg7[%c0_14, %c0_15] : memref<1x12xf32, #tpu.memory_space<vmem>>, vector<1x12xf32>
    %cst_16 = arith.constant dense<0.000000e+00> : vector<16x12xf32>
    %20 = tpu.matmul %17, %18, %cst_16 {dimension_numbers = #tpu.dot_dimension_numbers<[1], [0], [0], [1], [0, 0, 1, 1], [], []>} : vector<16x128xbf16>, vector<128x12xbf16>, vector<16x12xf32> -> vector<16x12xf32>
    %21 = vector.broadcast %19 : vector<1x12xf32> to vector<16x12xf32>
    %22 = arith.addf %20, %21 : vector<16x12xf32>
    %c0_17 = arith.constant 0 : index
    %c0_18 = arith.constant 0 : index
    %23 = vector.load %arg8[%c0_17, %c0_18] : memref<16x12xf32, #tpu.memory_space<vmem>>, vector<16x12xf32>
    tpu.vector_store %arg8[%c0_17, %c0_18], %22 {strides = array<i32>} : memref<16x12xf32, #tpu.memory_space<vmem>>, vector<16x12xf32>,
    return
  }
  func.func @transform_0(%arg0: i32) -> (i32, i32) {
    %c0_i32 = arith.constant 0 : i32
    %c0_i32_0 = arith.constant 0 : i32
    return %arg0, %c0_i32 : i32, i32
  }
  func.func @transform_1(%arg0: i32) -> (i32, i32) {
    %c0_i32 = arith.constant 0 : i32
    %c0_i32_0 = arith.constant 0 : i32
    %c0_i32_1 = arith.constant 0 : i32
    return %c0_i32, %c0_i32_0 : i32, i32
  }
  func.func @transform_2(%arg0: i32) -> (i32, i32) {
    %c0_i32 = arith.constant 0 : i32
    %c0_i32_0 = arith.constant 0 : i32
    %c0_i32_1 = arith.constant 0 : i32
    return %c0_i32, %c0_i32_0 : i32, i32
  }
  func.func @transform_3(%arg0: i32) -> (i32, i32) {
    %c0_i32 = arith.constant 0 : i32
    %c0_i32_0 = arith.constant 0 : i32
    %c0_i32_1 = arith.constant 0 : i32
    return %c0_i32, %c0_i32_0 : i32, i32
  }
  func.func @transform_4(%arg0: i32) -> (i32, i32) {
    %c0_i32 = arith.constant 0 : i32
    %c0_i32_0 = arith.constant 0 : i32
    %c0_i32_1 = arith.constant 0 : i32
    return %c0_i32, %c0_i32_0 : i32, i32
  }
  func.func @transform_5(%arg0: i32) -> (i32, i32) {
    %c0_i32 = arith.constant 0 : i32
    %c0_i32_0 = arith.constant 0 : i32
    %c0_i32_1 = arith.constant 0 : i32
    return %c0_i32, %c0_i32_0 : i32, i32
  }
  func.func @transform_6(%arg0: i32) -> (i32, i32) {
    %c0_i32 = arith.constant 0 : i32
    %c0_i32_0 = arith.constant 0 : i32
    %c0_i32_1 = arith.constant 0 : i32
    return %c0_i32, %c0_i32_0 : i32, i32
  }
  func.func @transform_7(%arg0: i32) -> (i32, i32) {
    %c0_i32 = arith.constant 0 : i32
    %c0_i32_0 = arith.constant 0 : i32
    return %arg0, %c0_i32 : i32, i32
  }
}

module attributes {stable_mosaic.version = 11 : i64} {
  func.func @kernel(%arg0: i32, %arg1: memref<16x24xf32, #tpu.memory_space<vmem>>, %arg2: memref<24x128xbf16, #tpu.memory_space<vmem>>, %arg3: memref<1x128xf32, #tpu.memory_space<vmem>>, %arg4: memref<128x128xbf16, #tpu.memory_space<vmem>>, %arg5: memref<1x128xf32, #tpu.memory_space<vmem>>, %arg6: memref<128x12xbf16, #tpu.memory_space<vmem>>, %arg7: memref<1x12xf32, #tpu.memory_space<vmem>>, %arg8: memref<16x12xf32, #tpu.memory_space<vmem>>) attributes {dimension_semantics = [#tpu.dimension_semantics<parallel>], iteration_bounds = array<i64: 2>, scalar_prefetch = 0 : i64, scratch_operands = 0 : i64, tpu.core_type = #tpu.core_type<tc>, window_params = [{transform_indices = @transform_0, window_bounds = array<i64: 16, 24>}, {pipeline_mode = #tpu.pipeline_mode<synchronous>, transform_indices = @transform_1, window_bounds = array<i64: 24, 128>}, {pipeline_mode = #tpu.pipeline_mode<synchronous>, transform_indices = @transform_2, window_bounds = array<i64: 1, 128>}, {pipeline_mode = #tpu.pipeline_mode<synchronous>, transform_indices = @transform_3, window_bounds = array<i64: 128, 128>}, {pipeline_mode = #tpu.pipeline_mode<synchronous>, transform_indices = @transform_4, window_bounds = array<i64: 1, 128>}, {pipeline_mode = #tpu.pipeline_mode<synchronous>, transform_indices = @transform_5, window_bounds = array<i64: 128, 12>}, {pipeline_mode = #tpu.pipeline_mode<synchronous>, transform_indices = @transform_6, window_bounds = array<i64: 1, 12>}, {transform_indices = @transform_7, window_bounds = array<i64: 16, 12>}]} {
    %c0 = arith.constant 0 : index
    %c0_0 = arith.constant 0 : index
    %0 = vector.load %arg1[%c0, %c0_0] : memref<16x24xf32, #tpu.memory_space<vmem>>, vector<16x24xf32>
    %1 = arith.truncf %0 : vector<16x24xf32> to vector<16x24xbf16>
    %c0_1 = arith.constant 0 : index
    %c0_2 = arith.constant 0 : index
    %2 = vector.load %arg2[%c0_1, %c0_2] : memref<24x128xbf16, #tpu.memory_space<vmem>>, vector<24x128xbf16>
    %c0_3 = arith.constant 0 : index
    %c0_4 = arith.constant 0 : index
    %3 = vector.load %arg3[%c0_3, %c0_4] : memref<1x128xf32, #tpu.memory_space<vmem>>, vector<1x128xf32>
    %cst = arith.constant dense<0.000000e+00> : vector<16x128xf32>
    %4 = tpu.matmul %1, %2, %cst {dimension_numbers = #tpu.dot_dimension_numbers<[1], [0], [0], [1], [0, 0, 1, 1], [], []>} : vector<16x24xbf16>, vector<24x128xbf16>, vector<16x128xf32> -> vector<16x128xf32>
    %5 = vector.broadcast %3 : vector<1x128xf32> to vector<16x128xf32>
    %6 = arith.addf %4, %5 : vector<16x128xf32>
    %cst_5 = arith.constant 0.000000e+00 : f32
    %7 = vector.broadcast %cst_5 : f32 to vector<16x128xf32>
    %8 = arith.maximumf %6, %7 : vector<16x128xf32>
    %9 = arith.truncf %8 : vector<16x128xf32> to vector<16x128xbf16>
    %c0_6 = arith.constant 0 : index
    %c0_7 = arith.constant 0 : index
    %10 = vector.load %arg4[%c0_6, %c0_7] : memref<128x128xbf16, #tpu.memory_space<vmem>>, vector<128x128xbf16>
    %c0_8 = arith.constant 0 : index
    %c0_9 = arith.constant 0 : index
    %11 = vector.load %arg5[%c0_8, %c0_9] : memref<1x128xf32, #tpu.memory_space<vmem>>, vector<1x128xf32>
    %cst_10 = arith.constant dense<0.000000e+00> : vector<16x128xf32>
    %12 = tpu.matmul %9, %10, %cst_10 {dimension_numbers = #tpu.dot_dimension_numbers<[1], [0], [0], [1], [0, 0, 1, 1], [], []>} : vector<16x128xbf16>, vector<128x128xbf16>, vector<16x128xf32> -> vector<16x128xf32>
    %13 = vector.broadcast %11 : vector<1x128xf32> to vector<16x128xf32>
    %14 = arith.addf %12, %13 : vector<16x128xf32>
    %cst_11 = arith.constant 0.000000e+00 : f32
    %15 = vector.broadcast %cst_11 : f32 to vector<16x128xf32>
    %16 = arith.maximumf %14, %15 : vector<16x128xf32>
    %17 = arith.truncf %16 : vector<16x128xf32> to vector<16x128xbf16>
    %c0_12 = arith.constant 0 : index
    %c0_13 = arith.constant 0 : index
    %18 = vector.load %arg6[%c0_12, %c0_13] : memref<128x12xbf16, #tpu.memory_space<vmem>>, vector<128x12xbf16>
    %c0_14 = arith.constant 0 : index
    %c0_15 = arith.constant 0 : index
    %19 = vector.load %arg7[%c0_14, %c0_15] : memref<1x12xf32, #tpu.memory_space<vmem>>, vector<1x12xf32>
    %cst_16 = arith.constant dense<0.000000e+00> : vector<16x12xf32>
    %20 = tpu.matmul %17, %18, %cst_16 {dimension_numbers = #tpu.dot_dimension_numbers<[1], [0], [0], [1], [0, 0, 1, 1], [], []>} : vector<16x128xbf16>, vector<128x12xbf16>, vector<16x12xf32> -> vector<16x12xf32>
    %21 = vector.broadcast %19 : vector<1x12xf32> to vector<16x12xf32>
    %22 = arith.addf %20, %21 : vector<16x12xf32>
    %c0_17 = arith.constant 0 : index
    %c0_18 = arith.constant 0 : index
    %23 = vector.load %arg8[%c0_17, %c0_18] : memref<16x12xf32, #tpu.memory_space<vmem>>, vector<16x12xf32>
    tpu.vector_store %arg8[%c0_17, %c0_18], %22 {strides = array<i32>} : memref<16x12xf32, #tpu.memory_space<vmem>>, vector<16x12xf32>,
    return
  }
  func.func @transform_0(%arg0: i32) -> (i32, i32) {
    %c0_i32 = arith.constant 0 : i32
    %c0_i32_0 = arith.constant 0 : i32
    return %arg0, %c0_i32 : i32, i32
  }
  func.func @transform_1(%arg0: i32) -> (i32, i32) {
    %c0_i32 = arith.constant 0 : i32
    %c0_i32_0 = arith.constant 0 : i32
    %c0_i32_1 = arith.constant 0 : i32
    return %c0_i32, %c0_i32_0 : i32, i32
  }
  func.func @transform_2(%arg0: i32) -> (i32, i32) {
    %c0_i32 = arith.constant 0 : i32
    %c0_i32_0 = arith.constant 0 : i32
    %c0_i32_1 = arith.constant 0 : i32
    return %c0_i32, %c0_i32_0 : i32, i32
  }
  func.func @transform_3(%arg0: i32) -> (i32, i32) {
    %c0_i32 = arith.constant 0 : i32
    %c0_i32_0 = arith.constant 0 : i32
    %c0_i32_1 = arith.constant 0 : i32
    return %c0_i32, %c0_i32_0 : i32, i32
  }
  func.func @transform_4(%arg0: i32) -> (i32, i32) {
    %c0_i32 = arith.constant 0 : i32
    %c0_i32_0 = arith.constant 0 : i32
    %c0_i32_1 = arith.constant 0 : i32
    return %c0_i32, %c0_i32_0 : i32, i32
  }
  func.func @transform_5(%arg0: i32) -> (i32, i32) {
    %c0_i32 = arith.constant 0 : i32
    %c0_i32_0 = arith.constant 0 : i32
    %c0_i32_1 = arith.constant 0 : i32
    return %c0_i32, %c0_i32_0 : i32, i32
  }
  func.func @transform_6(%arg0: i32) -> (i32, i32) {
    %c0_i32 = arith.constant 0 : i32
    %c0_i32_0 = arith.constant 0 : i32
    %c0_i32_1 = arith.constant 0 : i32
    return %c0_i32, %c0_i32_0 : i32, i32
  }
  func.func @transform_7(%arg0: i32) -> (i32, i32) {
    %c0_i32 = arith.constant 0 : i32
    %c0_i32_0 = arith.constant 0 : i32
    return %arg0, %c0_i32 : i32, i32
  }
}

</mosaic_0001>

<llo_original>
// kernel: tpu_custom_call.1
$region0: #{tpu_custom_call.1}
  #allocation0 [shape = 'u32[]', space=smem, size = 0x4, offset = 0x4, fixed_abs, tag = 'smem constant byte address 0x4 - core index']
  #allocation1 [shape = 'u32[72,128]{1,0:T(1,128)}', space=vmem, size = 0x9000, scoped, tag = 'internal scratch']
  %s0 = inlined_call_operand.vmem [shape: f32[32,24], index: 0, kind: input, shape index: {}]
  %s1 = inlined_call_operand.vmem [shape: bf16[24,128], index: 1, kind: input, shape index: {}]
  %s2 = inlined_call_operand.vmem [shape: f32[1,128], index: 2, kind: input, shape index: {}]
  %s3 = inlined_call_operand.vmem [shape: bf16[128,128], index: 3, kind: input, shape index: {}]
  %s4 = inlined_call_operand.vmem [shape: f32[1,128], index: 4, kind: input, shape index: {}]
  %s5 = inlined_call_operand.vmem [shape: bf16[128,12], index: 5, kind: input, shape index: {}]
  %s6 = inlined_call_operand.vmem [shape: f32[1,12], index: 6, kind: input, shape index: {}]
  %s7 = inlined_call_operand.vmem [shape: f32[32,12], index: 7, kind: output, shape index: {}]
  %s8 = sld [smem:[#allocation0]]
  $region61: #{tpu_custom_call.1} parent=0
    _
  %s10 = ssub.s32 1, %s8
  %s11 = scalar_select 0, %s10, %s8
  loop: start=0, step=1, limit=4
  $region2: #{tpu_custom_call.1} parent=0 // loop_pre_header
    _
  $region3: #{tpu_custom_call.1} parent=0 // loop_header
    %s13 = sphi 0, %s17
    %p14 = scmp.ge.s32.totalorder %s13, 4
    %s23 = sphi 0, %s25
    %s26 = sphi 0, %s23
    %s27 = sphi 0, %s26
    %s43 = sphi 0, %s27
    %s47 = sphi 0, %s47
    %s49 = sphi 0, %s47
    %s50 = sphi 0, %s49
    %s64 = sphi 0, %s50
    %s68 = sphi 0, %s68
    %s70 = sphi 0, %s68
    %s71 = sphi 0, %s70
    %s85 = sphi 0, %s71
    %s89 = sphi 0, %s89
    %s91 = sphi 0, %s89
    %s92 = sphi 0, %s91
    %s106 = sphi 0, %s92
    %s110 = sphi 0, %s110
    %s112 = sphi 0, %s110
    %s113 = sphi 0, %s112
    %s127 = sphi 0, %s113
    %s131 = sphi 0, %s131
    %s133 = sphi 0, %s131
    %s134 = sphi 0, %s133
    %s148 = sphi 0, %s134
    %s152 = sphi 0, %s152
    %s154 = sphi 0, %s152
    %s155 = sphi 0, %s154
    %s169 = sphi 0, %s155
    %s175 = sphi 0, %s177
    %s178 = sphi 0, %s175
    %s179 = sphi 0, %s178
    %s195 = sphi 0, %s179
  $region4: #{tpu_custom_call.1} parent=0 // loop_header_branch
    %16 = sbr.rel (%p14) target = $region8
  $region5: #{tpu_custom_call.1} parent=0 // loop_body
    %s18 = ssub.s32 %s13, 1
    %s19 = ssub.s32 %s13, 2
    %s20 = sadd.s32 %s13, 1
    %s21 = ssub.s32 %s13, %s20
    %p22 = scmp.eq.s32.totalorder %s21, 0
    %s24 = sadd.s32 %s23, 1
    %s25 = scalar_select %p22, %s23, %s24
    %p28 = pneg %p22
    %p29 = scmp.eq.s32.totalorder %s13, 1
    %p30 = por %p28, %p29
    %p31 = scmp.ne.s32.totalorder %s23, %s26
    %p32 = scmp.eq.s32.totalorder %s13, 0
    %p33 = por %p31, %p32
    %p34 = scmp.ne.s32.totalorder %s23, %s26
    %p35 = scmp.eq.s32.totalorder %s18, 1
    %p36 = por %p34, %p35
    %p37 = scmp.ne.s32.totalorder %s26, %s27
    %p38 = scmp.eq.s32.totalorder %s18, 0
    %p39 = por %p37, %p38
    %p40 = scmp.ne.s32.totalorder %s26, %s27
    %p41 = scmp.eq.s32.totalorder %s19, 1
    %p42 = por %p40, %p41
    %p44 = scmp.ne.s32.totalorder %s27, %s43
    %p45 = scmp.eq.s32.totalorder %s19, 0
    %p46 = por %p44, %p45
    %s48 = sadd.s32 %s47, 1
    %p51 = scmp.eq.s32.totalorder %s13, 1
    %p52 = scmp.ne.s32.totalorder %s47, %s49
    %p53 = scmp.eq.s32.totalorder %s13, 0
    %p54 = por %p52, %p53
    %p55 = scmp.ne.s32.totalorder %s47, %s49
    %p56 = scmp.eq.s32.totalorder %s18, 1
    %p57 = por %p55, %p56
    %p58 = scmp.ne.s32.totalorder %s49, %s50
    %p59 = scmp.eq.s32.totalorder %s18, 0
    %p60 = por %p58, %p59
    %p61 = scmp.ne.s32.totalorder %s49, %s50
    %p62 = scmp.eq.s32.totalorder %s19, 1
    %p63 = por %p61, %p62
    %p65 = scmp.ne.s32.totalorder %s50, %s64
    %p66 = scmp.eq.s32.totalorder %s19, 0
    %p67 = por %p65, %p66
    %s69 = sadd.s32 %s68, 1
    %p72 = scmp.eq.s32.totalorder %s13, 1
    %p73 = scmp.ne.s32.totalorder %s68, %s70
    %p74 = scmp.eq.s32.totalorder %s13, 0
    %p75 = por %p73, %p74
    %p76 = scmp.ne.s32.totalorder %s68, %s70
    %p77 = scmp.eq.s32.totalorder %s18, 1
    %p78 = por %p76, %p77
    %p79 = scmp.ne.s32.totalorder %s70, %s71
    %p80 = scmp.eq.s32.totalorder %s18, 0
    %p81 = por %p79, %p80
    %p82 = scmp.ne.s32.totalorder %s70, %s71
    %p83 = scmp.eq.s32.totalorder %s19, 1
    %p84 = por %p82, %p83
    %p86 = scmp.ne.s32.totalorder %s71, %s85
    %p87 = scmp.eq.s32.totalorder %s19, 0
    %p88 = por %p86, %p87
    %s90 = sadd.s32 %s89, 1
    %p93 = scmp.eq.s32.totalorder %s13, 1
    %p94 = scmp.ne.s32.totalorder %s89, %s91
    %p95 = scmp.eq.s32.totalorder %s13, 0
    %p96 = por %p94, %p95
    %p97 = scmp.ne.s32.totalorder %s89, %s91
    %p98 = scmp.eq.s32.totalorder %s18, 1
    %p99 = por %p97, %p98
    %p100 = scmp.ne.s32.totalorder %s91, %s92
    %p101 = scmp.eq.s32.totalorder %s18, 0
    %p102 = por %p100, %p101
    %p103 = scmp.ne.s32.totalorder %s91, %s92
    %p104 = scmp.eq.s32.totalorder %s19, 1
    %p105 = por %p103, %p104
    %p107 = scmp.ne.s32.totalorder %s92, %s106
    %p108 = scmp.eq.s32.totalorder %s19, 0
    %p109 = por %p107, %p108
    %s111 = sadd.s32 %s110, 1
    %p114 = scmp.eq.s32.totalorder %s13, 1
    %p115 = scmp.ne.s32.totalorder %s110, %s112
    %p116 = scmp.eq.s32.totalorder %s13, 0
    %p117 = por %p115, %p116
    %p118 = scmp.ne.s32.totalorder %s110, %s112
    %p119 = scmp.eq.s32.totalorder %s18, 1
    %p120 = por %p118, %p119
    %p121 = scmp.ne.s32.totalorder %s112, %s113
    %p122 = scmp.eq.s32.totalorder %s18, 0
    %p123 = por %p121, %p122
    %p124 = scmp.ne.s32.totalorder %s112, %s113
    %p125 = scmp.eq.s32.totalorder %s19, 1
    %p126 = por %p124, %p125
    %p128 = scmp.ne.s32.totalorder %s113, %s127
    %p129 = scmp.eq.s32.totalorder %s19, 0
    %p130 = por %p128, %p129
    %s132 = sadd.s32 %s131, 1
    %p135 = scmp.eq.s32.totalorder %s13, 1
    %p136 = scmp.ne.s32.totalorder %s131, %s133
    %p137 = scmp.eq.s32.totalorder %s13, 0
    %p138 = por %p136, %p137
    %p139 = scmp.ne.s32.totalorder %s131, %s133
    %p140 = scmp.eq.s32.totalorder %s18, 1
    %p141 = por %p139, %p140
    %p142 = scmp.ne.s32.totalorder %s133, %s134
    %p143 = scmp.eq.s32.totalorder %s18, 0
    %p144 = por %p142, %p143
    %p145 = scmp.ne.s32.totalorder %s133, %s134
    %p146 = scmp.eq.s32.totalorder %s19, 1
    %p147 = por %p145, %p146
    %p149 = scmp.ne.s32.totalorder %s134, %s148
    %p150 = scmp.eq.s32.totalorder %s19, 0
    %p151 = por %p149, %p150
    %s153 = sadd.s32 %s152, 1
    %p156 = scmp.eq.s32.totalorder %s13, 1
    %p157 = scmp.ne.s32.totalorder %s152, %s154
    %p158 = scmp.eq.s32.totalorder %s13, 0
    %p159 = por %p157, %p158
    %p160 = scmp.ne.s32.totalorder %s152, %s154
    %p161 = scmp.eq.s32.totalorder %s18, 1
    %p162 = por %p160, %p161
    %p163 = scmp.ne.s32.totalorder %s154, %s155
    %p164 = scmp.eq.s32.totalorder %s18, 0
    %p165 = por %p163, %p164
    %p166 = scmp.ne.s32.totalorder %s154, %s155
    %p167 = scmp.eq.s32.totalorder %s19, 1
    %p168 = por %p166, %p167
    %p170 = scmp.ne.s32.totalorder %s155, %s169
    %p171 = scmp.eq.s32.totalorder %s19, 0
    %p172 = por %p170, %p171
    %s173 = ssub.s32 %s13, %s20
    %p174 = scmp.eq.s32.totalorder %s173, 0
    %s176 = sadd.s32 %s175, 1
    %s177 = scalar_select %p174, %s175, %s176
    %p180 = pneg %p174
    %p181 = scmp.eq.s32.totalorder %s13, 1
    %p182 = por %p180, %p181
    %p183 = scmp.ne.s32.totalorder %s175, %s178
    %p184 = scmp.eq.s32.totalorder %s13, 0
    %p185 = por %p183, %p184
    %p186 = scmp.ne.s32.totalorder %s175, %s178
    %p187 = scmp.eq.s32.totalorder %s18, 1
    %p188 = por %p186, %p187
    %p189 = scmp.ne.s32.totalorder %s178, %s179
    %p190 = scmp.eq.s32.totalorder %s18, 0
    %p191 = por %p189, %p190
    %p192 = scmp.ne.s32.totalorder %s178, %s179
    %p193 = scmp.eq.s32.totalorder %s19, 1
    %p194 = por %p192, %p193
    %p196 = scmp.ne.s32.totalorder %s179, %s195
    %p197 = scmp.eq.s32.totalorder %s19, 0
    %p198 = por %p196, %p197
    %p199 = scmp.le.s32.totalorder 1, %s13
    %p200 = scmp.lt.s32.totalorder %s13, 3
    %p201 = pnand %p199, %p200
    %p202 = pneg %p201
    // Predicated region
    $region9: #{tpu_custom_call.1} parent=5 // pred_check
      _
    $region10: #{tpu_custom_call.1} parent=5 // pred_check_branch
      %204 = sbr.rel (%p201) target = $region12
    $region11: #{tpu_custom_call.1} parent=5 // pred_region
      %s205 = ssub.s32 %s13, 1
      // Predicated region
      $region13: #{tpu_custom_call.1} parent=11 // pred_check
        %p206 = pneg %p60
      $region14: #{tpu_custom_call.1} parent=11 // pred_check_branch
        %208 = sbr.rel (%p206) target = $region16
      $region15: #{tpu_custom_call.1} parent=11 // pred_region
        _
      $region16: #{tpu_custom_call.1} parent=11 // pred_fallthru
        _
      // Predicated region
      $region17: #{tpu_custom_call.1} parent=11 // pred_check
        %p209 = pneg %p81
      $region18: #{tpu_custom_call.1} parent=11 // pred_check_branch
        %211 = sbr.rel (%p209) target = $region20
      $region19: #{tpu_custom_call.1} parent=11 // pred_region
        _
      $region20: #{tpu_custom_call.1} parent=11 // pred_fallthru
        _
      // Predicated region
      $region21: #{tpu_custom_call.1} parent=11 // pred_check
        %p212 = pneg %p102
      $region22: #{tpu_custom_call.1} parent=11 // pred_check_branch
        %214 = sbr.rel (%p212) target = $region24
      $region23: #{tpu_custom_call.1} parent=11 // pred_region
        _
      $region24: #{tpu_custom_call.1} parent=11 // pred_fallthru
        _
      // Predicated region
      $region25: #{tpu_custom_call.1} parent=11 // pred_check
        %p215 = pneg %p123
      $region26: #{tpu_custom_call.1} parent=11 // pred_check_branch
        %217 = sbr.rel (%p215) target = $region28
      $region27: #{tpu_custom_call.1} parent=11 // pred_region
        _
      $region28: #{tpu_custom_call.1} parent=11 // pred_fallthru
        _
      // Predicated region
      $region29: #{tpu_custom_call.1} parent=11 // pred_check
        %p218 = pneg %p144
      $region30: #{tpu_custom_call.1} parent=11 // pred_check_branch
        %220 = sbr.rel (%p218) target = $region32
      $region31: #{tpu_custom_call.1} parent=11 // pred_region
        _
      $region32: #{tpu_custom_call.1} parent=11 // pred_fallthru
        _
      // Predicated region
      $region33: #{tpu_custom_call.1} parent=11 // pred_check
        %p221 = pneg %p165
      $region34: #{tpu_custom_call.1} parent=11 // pred_check_branch
        %223 = sbr.rel (%p221) target = $region36
      $region35: #{tpu_custom_call.1} parent=11 // pred_region
        _
      $region36: #{tpu_custom_call.1} parent=11 // pred_fallthru
        _
    $region12: #{tpu_custom_call.1} parent=5 // pred_fallthru
      _
    %p224 = scmp.lt.s32.totalorder %s13, 2
    // Predicated region
    $region37: #{tpu_custom_call.1} parent=5 // pred_check
      %p225 = pneg %p224
    $region38: #{tpu_custom_call.1} parent=5 // pred_check_branch
      %227 = sbr.rel (%p225) target = $region40
    $region39: #{tpu_custom_call.1} parent=5 // pred_region
      // Predicated region
      $region41: #{tpu_custom_call.1} parent=39 // pred_check
        %p228 = pneg %p33
      $region42: #{tpu_custom_call.1} parent=39 // pred_check_branch
        %230 = sbr.rel (%p228) target = $region44
      $region43: #{tpu_custom_call.1} parent=39 // pred_region
        %s231 = smul.u32 2, %s13
        %p232 = scmp.lt.s32.totalorder %s231, 3
        %s233 = scalar_select %p232, %s231, 3
        %s234 = smul.addr %s233, 8
        %s235 = scalar_lea.vmem %s0, %s234
        %s236 = smul.u32 2, %s13
      $region44: #{tpu_custom_call.1} parent=39 // pred_fallthru
        _
    $region40: #{tpu_custom_call.1} parent=5 // pred_fallthru
      _
    %p237 = scmp.le.s32.totalorder 1, %s13
    %p238 = scmp.lt.s32.totalorder %s13, 3
    %p239 = pnand %p237, %p238
    %p240 = pneg %p239
    // Predicated region
    $region45: #{tpu_custom_call.1} parent=5 // pred_check
      _
    $region46: #{tpu_custom_call.1} parent=5 // pred_check_branch
      %242 = sbr.rel (%p239) target = $region48
    $region47: #{tpu_custom_call.1} parent=5 // pred_region
      %s243 = ssub.s32 %s13, 1
      %s244 = smul.u32 2, %s18
      %p245 = scmp.lt.s32.totalorder %s244, 3
      %s246 = scalar_select %p245, %s244, 3
      %s247 = smul.addr %s246, 8
      %s248 = scalar_lea.vmem %s0, %s247
      %p249 = pneg %p39
      %p250 = pneg %p36
      %p251 = pneg %p60
      %p252 = pneg %p57
      %p253 = pneg %p81
      %p254 = pneg %p78
      %p255 = pneg %p102
      %p256 = pneg %p99
      %p257 = pneg %p123
      %p258 = pneg %p120
      %p259 = pneg %p144
      %p260 = pneg %p141
      %p261 = pneg %p165
      %p262 = pneg %p162
      %p263 = pneg %p191
      %p264 = pneg %p188
      %s265 = smul.u32 2, %s18
      %p266 = scmp.lt.s32.totalorder %s265, 3
      %s267 = scalar_select %p266, %s265, 3
      %s268 = smul.addr %s267, 8
      %s269 = scalar_lea.vmem %s7, %s268
      %s270 = smul.u32 2, %s18
      %p271 = scmp.lt.s32.totalorder %s270, 3
      %s272 = scalar_select %p271, %s270, 3
      %s273 = smul.addr %s272, 8
      %s274 = scalar_lea.vmem %s0, %s273
      %s275 = smul.u32 2, %s18
      %s276 = smul.u32 2, %s18
      %p277 = scmp.lt.s32.totalorder %s276, 3
      %s278 = scalar_select %p277, %s276, 3
      %s279 = smul.addr %s278, 8
      %s280 = scalar_lea.vmem %s7, %s279
      %s281 = smul.u32 2, %s18
      %v283 = vld [vmem:[%s274] sm:$0xff]
      %v284 = vld [vmem:[%s274 + $0x8] sm:$0xff]
      %v285 = vpack.c.bf16 %v284, %v283
      %v286 = vld [vmem:[%s1] sm:$0xf]
      %v287 = vld [vmem:[%s1 + $0x4] sm:$0xf]
      %v288 = vld [vmem:[%s1 + $0x8] sm:$0xf]
      %v289 = vld [vmem:[%s2] sm:$0x1]
      %v291 = vperm.slane %v289, 0
      %v296 = vunpack.c.l.b16 %v286
      %v297 = vunpack.c.l.b16 %v287
      %v298 = vunpack.c.l.b16 %v288
      %v299 = vpack.c.b16 %v297, %v296
      %v300 = vpack.c.b16 %v298, %v298
      %vm302 = vcmask 195584
      %v304 = vsel %vm302, %v285, 0
      %vm306 = vcmask 1043456
      %v308 = vsel %vm306, %v300, 0
      %310 = vmatpush.bf16.msra.mxu0 0
      %311 = vmatpush.bf16.msra.mxu0 0
      %312 = vmatpush.bf16.msra.mxu0 0
      %313 = vmatpush.bf16.msra.mxu0 0
      %314 = vmatpush.bf16.msra.mxu0 0
      %315 = vmatpush.bf16.msra.mxu0 0
      %316 = vmatpush.bf16.msra.mxu0 %v308
      %317 = vmatpush.bf16.msra.mxu0 %v299
      %318 = vmatmul.bf16.gmra.mxu0 %v304
      %v319 = vpop.f32.mrf.mxu0
      %v320 = vadd.f32 %v291, %v319
      %v321 = vpop.f32.mrf.mxu0
      %v322 = vadd.f32 %v291, %v321
      %323 = vdwg.mxu0
      %v324 = vmax.f32 %v320, 0.0
      %v325 = vmax.f32 %v322, 0.0
      %v326 = vpack.c.bf16 %v325, %v324
      %v327 = vld [vmem:[%s3] sm:$0xf]
      %v328 = vld [vmem:[%s3 + $0x4] sm:$0xf]
      %v329 = vld [vmem:[%s3 + $0x8] sm:$0xf]
      %v330 = vld [vmem:[%s3 + $0xc] sm:$0xf]
      %v331 = vld [vmem:[%s3 + $0x10] sm:$0xf]
      %v332 = vld [vmem:[%s3 + $0x14] sm:$0xf]
      %v333 = vld [vmem:[%s3 + $0x18] sm:$0xf]
      %v334 = vld [vmem:[%s3 + $0x1c] sm:$0xf]
      %v335 = vld [vmem:[%s3 + $0x20] sm:$0xf]
      %v336 = vld [vmem:[%s3 + $0x24] sm:$0xf]
      %v337 = vld [vmem:[%s3 + $0x28] sm:$0xf]
      %v338 = vld [vmem:[%s3 + $0x2c] sm:$0xf]
      %v339 = vld [vmem:[%s3 + $0x30] sm:$0xf]
      %v340 = vld [vmem:[%s3 + $0x34] sm:$0xf]
      %v341 = vld [vmem:[%s3 + $0x38] sm:$0xf]
      %v342 = vld [vmem:[%s3 + $0x3c] sm:$0xf]
      %v343 = vld [vmem:[%s4] sm:$0x1]
      %v345 = vperm.slane %v343, 0
      %v363 = vunpack.c.l.b16 %v327
      %v364 = vunpack.c.l.b16 %v328
      %v365 = vunpack.c.l.b16 %v329
      %v366 = vunpack.c.l.b16 %v330
      %v367 = vunpack.c.l.b16 %v331
      %v368 = vunpack.c.l.b16 %v332
      %v369 = vunpack.c.l.b16 %v333
      %v370 = vunpack.c.l.b16 %v334
      %v371 = vunpack.c.l.b16 %v335
      %v372 = vunpack.c.l.b16 %v336
      %v373 = vunpack.c.l.b16 %v337
      %v374 = vunpack.c.l.b16 %v338
      %v375 = vunpack.c.l.b16 %v339
      %v376 = vunpack.c.l.b16 %v340
      %v377 = vunpack.c.l.b16 %v341
      %v378 = vunpack.c.l.b16 %v342
      %v379 = vpack.c.b16 %v364, %v363
      %v380 = vpack.c.b16 %v366, %v365
      %v381 = vpack.c.b16 %v368, %v367
      %v382 = vpack.c.b16 %v370, %v369
      %v383 = vpack.c.b16 %v372, %v371
      %v384 = vpack.c.b16 %v374, %v373
      %v385 = vpack.c.b16 %v376, %v375
      %v386 = vpack.c.b16 %v378, %v377
      %395 = vmatpush.bf16.msra.mxu0 %v386
      %396 = vmatpush.bf16.msra.mxu0 %v385
      %397 = vmatpush.bf16.msra.mxu0 %v384
      %398 = vmatpush.bf16.msra.mxu0 %v383
      %399 = vmatpush.bf16.msra.mxu0 %v382
      %400 = vmatpush.bf16.msra.mxu0 %v381
      %401 = vmatpush.bf16.msra.mxu0 %v380
      %402 = vmatpush.bf16.msra.mxu0 %v379
      %403 = vmatmul.bf16.gmra.mxu0 %v326
      %v404 = vpop.f32.mrf.mxu0
      %v405 = vadd.f32 %v345, %v404
      %v406 = vpop.f32.mrf.mxu0
      %v407 = vadd.f32 %v345, %v406
      %408 = vdwg.mxu0
      %v409 = vmax.f32 %v405, 0.0
      %v410 = vmax.f32 %v407, 0.0
      %v411 = vpack.c.bf16 %v410, %v409
      %v412 = vld [vmem:[%s5] sm:$0xf]
      %v413 = vld [vmem:[%s5 + $0x4] sm:$0xf]
      %v414 = vld [vmem:[%s5 + $0x8] sm:$0xf]
      %v415 = vld [vmem:[%s5 + $0xc] sm:$0xf]
      %v416 = vld [vmem:[%s5 + $0x10] sm:$0xf]
      %v417 = vld [vmem:[%s5 + $0x14] sm:$0xf]
      %v418 = vld [vmem:[%s5 + $0x18] sm:$0xf]
      %v419 = vld [vmem:[%s5 + $0x1c] sm:$0xf]
      %v420 = vld [vmem:[%s5 + $0x20] sm:$0xf]
      %v421 = vld [vmem:[%s5 + $0x24] sm:$0xf]
      %v422 = vld [vmem:[%s5 + $0x28] sm:$0xf]
      %v423 = vld [vmem:[%s5 + $0x2c] sm:$0xf]
      %v424 = vld [vmem:[%s5 + $0x30] sm:$0xf]
      %v425 = vld [vmem:[%s5 + $0x34] sm:$0xf]
      %v426 = vld [vmem:[%s5 + $0x38] sm:$0xf]
      %v427 = vld [vmem:[%s5 + $0x3c] sm:$0xf]
      %v428 = vld [vmem:[%s6] sm:$0x1]
      %v430 = vperm.slane %v428, 0
      %v448 = vunpack.c.l.b16 %v412
      %v449 = vunpack.c.l.b16 %v413
      %v450 = vunpack.c.l.b16 %v414
      %v451 = vunpack.c.l.b16 %v415
      %v452 = vunpack.c.l.b16 %v416
      %v453 = vunpack.c.l.b16 %v417
      %v454 = vunpack.c.l.b16 %v418
      %v455 = vunpack.c.l.b16 %v419
      %v456 = vunpack.c.l.b16 %v420
      %v457 = vunpack.c.l.b16 %v421
      %v458 = vunpack.c.l.b16 %v422
      %v459 = vunpack.c.l.b16 %v423
      %v460 = vunpack.c.l.b16 %v424
      %v461 = vunpack.c.l.b16 %v425
      %v462 = vunpack.c.l.b16 %v426
      %v463 = vunpack.c.l.b16 %v427
      %v464 = vpack.c.b16 %v449, %v448
      %v465 = vpack.c.b16 %v451, %v450
      %v466 = vpack.c.b16 %v453, %v452
      %v467 = vpack.c.b16 %v455, %v454
      %v468 = vpack.c.b16 %v457, %v456
      %v469 = vpack.c.b16 %v459, %v458
      %v470 = vpack.c.b16 %v461, %v460
      %v471 = vpack.c.b16 %v463, %v462
      %480 = vmatpush.bf16.msra.mxu0 %v471
      %481 = vmatpush.bf16.msra.mxu0 %v470
      %482 = vmatpush.bf16.msra.mxu0 %v469
      %483 = vmatpush.bf16.msra.mxu0 %v468
      %484 = vmatpush.bf16.msra.mxu0 %v467
      %485 = vmatpush.bf16.msra.mxu0 %v466
      %486 = vmatpush.bf16.msra.mxu0 %v465
      %487 = vmatpush.bf16.msra.mxu0 %v464
      %488 = vmatmul.bf16.gmra.mxu0 %v411
      %v489 = vpop.f32.mrf.mxu0
      %v490 = vadd.f32 %v430, %v489
      %v491 = vpop.f32.mrf.mxu0
      %v492 = vadd.f32 %v430, %v491
      %493 = vdwg.mxu0
      %vm494 = vcmask 97280
      %495 = vst.msk [vmem:[%s280] sm:$0xff] %vm494, %v490
      %496 = vst.msk [vmem:[%s280 + $0x8] sm:$0xff] %vm494, %v492
      %s497 = smul.u32 2, %s18
      %p498 = scmp.lt.s32.totalorder %s497, 3
      %s499 = scalar_select %p498, %s497, 3
      %s500 = smul.addr %s499, 8
      %s501 = scalar_lea.vmem %s7, %s500
      // Predicated region
      $region49: #{tpu_custom_call.1} parent=47 // pred_check
        %p502 = pneg %p188
      $region50: #{tpu_custom_call.1} parent=47 // pred_check_branch
        %504 = sbr.rel (%p502) target = $region52
      $region51: #{tpu_custom_call.1} parent=47 // pred_region
        %s505 = smul.u32 2, %s18
      $region52: #{tpu_custom_call.1} parent=47 // pred_fallthru
        _
    $region48: #{tpu_custom_call.1} parent=5 // pred_fallthru
      _
    %p506 = scmp.le.s32.totalorder 2, %s13
    // Predicated region
    $region53: #{tpu_custom_call.1} parent=5 // pred_check
      %p507 = pneg %p506
    $region54: #{tpu_custom_call.1} parent=5 // pred_check_branch
      %509 = sbr.rel (%p507) target = $region56
    $region55: #{tpu_custom_call.1} parent=5 // pred_region
      %s510 = ssub.s32 %s13, 2
      // Predicated region
      $region57: #{tpu_custom_call.1} parent=55 // pred_check
        %p511 = pneg %p194
      $region58: #{tpu_custom_call.1} parent=55 // pred_check_branch
        %513 = sbr.rel (%p511) target = $region60
      $region59: #{tpu_custom_call.1} parent=55 // pred_region
        %s514 = smul.u32 2, %s19
        %p515 = scmp.lt.s32.totalorder %s514, 3
        %s516 = scalar_select %p515, %s514, 3
        %s517 = smul.addr %s516, 8
        %s518 = scalar_lea.vmem %s7, %s517
      $region60: #{tpu_custom_call.1} parent=55 // pred_fallthru
        _
    $region56: #{tpu_custom_call.1} parent=5 // pred_fallthru
      _
  $region6: #{tpu_custom_call.1} parent=0 // loop_footer
    %s17 = sadd.s32 1, %s13
  $region7: #{tpu_custom_call.1} parent=0 // loop_footer_branch
    %12 = sbr.rel target = $region3
  $region8: #{tpu_custom_call.1} parent=0 // loop_exit
    _

// kernel: tpu_custom_call.1
$region0: #{tpu_custom_call.1}
  #allocation0 [shape = 'u32[]', space=smem, size = 0x4, offset = 0x4, fixed_abs, tag = 'smem constant byte address 0x4 - core index']
  #allocation1 [shape = 'u32[72,128]{1,0:T(1,128)}', space=vmem, size = 0x9000, scoped, tag = 'internal scratch']
  %s0 = inlined_call_operand.vmem [shape: f32[32,24], index: 0, kind: input, shape index: {}]
  %s1 = inlined_call_operand.vmem [shape: bf16[24,128], index: 1, kind: input, shape index: {}]
  %s2 = inlined_call_operand.vmem [shape: f32[1,128], index: 2, kind: input, shape index: {}]
  %s3 = inlined_call_operand.vmem [shape: bf16[128,128], index: 3, kind: input, shape index: {}]
  %s4 = inlined_call_operand.vmem [shape: f32[1,128], index: 4, kind: input, shape index: {}]
  %s5 = inlined_call_operand.vmem [shape: bf16[128,12], index: 5, kind: input, shape index: {}]
  %s6 = inlined_call_operand.vmem [shape: f32[1,12], index: 6, kind: input, shape index: {}]
  %s7 = inlined_call_operand.vmem [shape: f32[32,12], index: 7, kind: output, shape index: {}]
  %s8 = sld [smem:[#allocation0]]
  $region61: #{tpu_custom_call.1} parent=0
    _
  %s10 = ssub.s32 1, %s8
  %s11 = scalar_select 0, %s10, %s8
  loop: start=0, step=1, limit=4
  $region2: #{tpu_custom_call.1} parent=0 // loop_pre_header
    _
  $region3: #{tpu_custom_call.1} parent=0 // loop_header
    %s13 = sphi 0, %s17
    %p14 = scmp.ge.s32.totalorder %s13, 4
    %s23 = sphi 0, %s25
    %s26 = sphi 0, %s23
    %s27 = sphi 0, %s26
    %s43 = sphi 0, %s27
    %s47 = sphi 0, %s47
    %s49 = sphi 0, %s47
    %s50 = sphi 0, %s49
    %s64 = sphi 0, %s50
    %s68 = sphi 0, %s68
    %s70 = sphi 0, %s68
    %s71 = sphi 0, %s70
    %s85 = sphi 0, %s71
    %s89 = sphi 0, %s89
    %s91 = sphi 0, %s89
    %s92 = sphi 0, %s91
    %s106 = sphi 0, %s92
    %s110 = sphi 0, %s110
    %s112 = sphi 0, %s110
    %s113 = sphi 0, %s112
    %s127 = sphi 0, %s113
    %s131 = sphi 0, %s131
    %s133 = sphi 0, %s131
    %s134 = sphi 0, %s133
    %s148 = sphi 0, %s134
    %s152 = sphi 0, %s152
    %s154 = sphi 0, %s152
    %s155 = sphi 0, %s154
    %s169 = sphi 0, %s155
    %s175 = sphi 0, %s177
    %s178 = sphi 0, %s175
    %s179 = sphi 0, %s178
    %s195 = sphi 0, %s179
  $region4: #{tpu_custom_call.1} parent=0 // loop_header_branch
    %16 = sbr.rel (%p14) target = $region8
  $region5: #{tpu_custom_call.1} parent=0 // loop_body
    %s18 = ssub.s32 %s13, 1
    %s19 = ssub.s32 %s13, 2
    %s20 = sadd.s32 %s13, 1
    %s21 = ssub.s32 %s13, %s20
    %p22 = scmp.eq.s32.totalorder %s21, 0
    %s24 = sadd.s32 %s23, 1
    %s25 = scalar_select %p22, %s23, %s24
    %p28 = pneg %p22
    %p29 = scmp.eq.s32.totalorder %s13, 1
    %p30 = por %p28, %p29
    %p31 = scmp.ne.s32.totalorder %s23, %s26
    %p32 = scmp.eq.s32.totalorder %s13, 0
    %p33 = por %p31, %p32
    %p34 = scmp.ne.s32.totalorder %s23, %s26
    %p35 = scmp.eq.s32.totalorder %s18, 1
    %p36 = por %p34, %p35
    %p37 = scmp.ne.s32.totalorder %s26, %s27
    %p38 = scmp.eq.s32.totalorder %s18, 0
    %p39 = por %p37, %p38
    %p40 = scmp.ne.s32.totalorder %s26, %s27
    %p41 = scmp.eq.s32.totalorder %s19, 1
    %p42 = por %p40, %p41
    %p44 = scmp.ne.s32.totalorder %s27, %s43
    %p45 = scmp.eq.s32.totalorder %s19, 0
    %p46 = por %p44, %p45
    %s48 = sadd.s32 %s47, 1
    %p51 = scmp.eq.s32.totalorder %s13, 1
    %p52 = scmp.ne.s32.totalorder %s47, %s49
    %p53 = scmp.eq.s32.totalorder %s13, 0
    %p54 = por %p52, %p53
    %p55 = scmp.ne.s32.totalorder %s47, %s49
    %p56 = scmp.eq.s32.totalorder %s18, 1
    %p57 = por %p55, %p56
    %p58 = scmp.ne.s32.totalorder %s49, %s50
    %p59 = scmp.eq.s32.totalorder %s18, 0
    %p60 = por %p58, %p59
    %p61 = scmp.ne.s32.totalorder %s49, %s50
    %p62 = scmp.eq.s32.totalorder %s19, 1
    %p63 = por %p61, %p62
    %p65 = scmp.ne.s32.totalorder %s50, %s64
    %p66 = scmp.eq.s32.totalorder %s19, 0
    %p67 = por %p65, %p66
    %s69 = sadd.s32 %s68, 1
    %p72 = scmp.eq.s32.totalorder %s13, 1
    %p73 = scmp.ne.s32.totalorder %s68, %s70
    %p74 = scmp.eq.s32.totalorder %s13, 0
    %p75 = por %p73, %p74
    %p76 = scmp.ne.s32.totalorder %s68, %s70
    %p77 = scmp.eq.s32.totalorder %s18, 1
    %p78 = por %p76, %p77
    %p79 = scmp.ne.s32.totalorder %s70, %s71
    %p80 = scmp.eq.s32.totalorder %s18, 0
    %p81 = por %p79, %p80
    %p82 = scmp.ne.s32.totalorder %s70, %s71
    %p83 = scmp.eq.s32.totalorder %s19, 1
    %p84 = por %p82, %p83
    %p86 = scmp.ne.s32.totalorder %s71, %s85
    %p87 = scmp.eq.s32.totalorder %s19, 0
    %p88 = por %p86, %p87
    %s90 = sadd.s32 %s89, 1
    %p93 = scmp.eq.s32.totalorder %s13, 1
    %p94 = scmp.ne.s32.totalorder %s89, %s91
    %p95 = scmp.eq.s32.totalorder %s13, 0
    %p96 = por %p94, %p95
    %p97 = scmp.ne.s32.totalorder %s89, %s91
    %p98 = scmp.eq.s32.totalorder %s18, 1
    %p99 = por %p97, %p98
    %p100 = scmp.ne.s32.totalorder %s91, %s92
    %p101 = scmp.eq.s32.totalorder %s18, 0
    %p102 = por %p100, %p101
    %p103 = scmp.ne.s32.totalorder %s91, %s92
    %p104 = scmp.eq.s32.totalorder %s19, 1
    %p105 = por %p103, %p104
    %p107 = scmp.ne.s32.totalorder %s92, %s106
    %p108 = scmp.eq.s32.totalorder %s19, 0
    %p109 = por %p107, %p108
    %s111 = sadd.s32 %s110, 1
    %p114 = scmp.eq.s32.totalorder %s13, 1
    %p115 = scmp.ne.s32.totalorder %s110, %s112
    %p116 = scmp.eq.s32.totalorder %s13, 0
    %p117 = por %p115, %p116
    %p118 = scmp.ne.s32.totalorder %s110, %s112
    %p119 = scmp.eq.s32.totalorder %s18, 1
    %p120 = por %p118, %p119
    %p121 = scmp.ne.s32.totalorder %s112, %s113
    %p122 = scmp.eq.s32.totalorder %s18, 0
    %p123 = por %p121, %p122
    %p124 = scmp.ne.s32.totalorder %s112, %s113
    %p125 = scmp.eq.s32.totalorder %s19, 1
    %p126 = por %p124, %p125
    %p128 = scmp.ne.s32.totalorder %s113, %s127
    %p129 = scmp.eq.s32.totalorder %s19, 0
    %p130 = por %p128, %p129
    %s132 = sadd.s32 %s131, 1
    %p135 = scmp.eq.s32.totalorder %s13, 1
    %p136 = scmp.ne.s32.totalorder %s131, %s133
    %p137 = scmp.eq.s32.totalorder %s13, 0
    %p138 = por %p136, %p137
    %p139 = scmp.ne.s32.totalorder %s131, %s133
    %p140 = scmp.eq.s32.totalorder %s18, 1
    %p141 = por %p139, %p140
    %p142 = scmp.ne.s32.totalorder %s133, %s134
    %p143 = scmp.eq.s32.totalorder %s18, 0
    %p144 = por %p142, %p143
    %p145 = scmp.ne.s32.totalorder %s133, %s134
    %p146 = scmp.eq.s32.totalorder %s19, 1
    %p147 = por %p145, %p146
    %p149 = scmp.ne.s32.totalorder %s134, %s148
    %p150 = scmp.eq.s32.totalorder %s19, 0
    %p151 = por %p149, %p150
    %s153 = sadd.s32 %s152, 1
    %p156 = scmp.eq.s32.totalorder %s13, 1
    %p157 = scmp.ne.s32.totalorder %s152, %s154
    %p158 = scmp.eq.s32.totalorder %s13, 0
    %p159 = por %p157, %p158
    %p160 = scmp.ne.s32.totalorder %s152, %s154
    %p161 = scmp.eq.s32.totalorder %s18, 1
    %p162 = por %p160, %p161
    %p163 = scmp.ne.s32.totalorder %s154, %s155
    %p164 = scmp.eq.s32.totalorder %s18, 0
    %p165 = por %p163, %p164
    %p166 = scmp.ne.s32.totalorder %s154, %s155
    %p167 = scmp.eq.s32.totalorder %s19, 1
    %p168 = por %p166, %p167
    %p170 = scmp.ne.s32.totalorder %s155, %s169
    %p171 = scmp.eq.s32.totalorder %s19, 0
    %p172 = por %p170, %p171
    %s173 = ssub.s32 %s13, %s20
    %p174 = scmp.eq.s32.totalorder %s173, 0
    %s176 = sadd.s32 %s175, 1
    %s177 = scalar_select %p174, %s175, %s176
    %p180 = pneg %p174
    %p181 = scmp.eq.s32.totalorder %s13, 1
    %p182 = por %p180, %p181
    %p183 = scmp.ne.s32.totalorder %s175, %s178
    %p184 = scmp.eq.s32.totalorder %s13, 0
    %p185 = por %p183, %p184
    %p186 = scmp.ne.s32.totalorder %s175, %s178
    %p187 = scmp.eq.s32.totalorder %s18, 1
    %p188 = por %p186, %p187
    %p189 = scmp.ne.s32.totalorder %s178, %s179
    %p190 = scmp.eq.s32.totalorder %s18, 0
    %p191 = por %p189, %p190
    %p192 = scmp.ne.s32.totalorder %s178, %s179
    %p193 = scmp.eq.s32.totalorder %s19, 1
    %p194 = por %p192, %p193
    %p196 = scmp.ne.s32.totalorder %s179, %s195
    %p197 = scmp.eq.s32.totalorder %s19, 0
    %p198 = por %p196, %p197
    %p199 = scmp.le.s32.totalorder 1, %s13
    %p200 = scmp.lt.s32.totalorder %s13, 3
    %p201 = pnand %p199, %p200
    %p202 = pneg %p201
    // Predicated region
    $region9: #{tpu_custom_call.1} parent=5 // pred_check
      _
    $region10: #{tpu_custom_call.1} parent=5 // pred_check_branch
      %204 = sbr.rel (%p201) target = $region12
    $region11: #{tpu_custom_call.1} parent=5 // pred_region
      %s205 = ssub.s32 %s13, 1
      // Predicated region
      $region13: #{tpu_custom_call.1} parent=11 // pred_check
        %p206 = pneg %p60
      $region14: #{tpu_custom_call.1} parent=11 // pred_check_branch
        %208 = sbr.rel (%p206) target = $region16
      $region15: #{tpu_custom_call.1} parent=11 // pred_region
        _
      $region16: #{tpu_custom_call.1} parent=11 // pred_fallthru
        _
      // Predicated region
      $region17: #{tpu_custom_call.1} parent=11 // pred_check
        %p209 = pneg %p81
      $region18: #{tpu_custom_call.1} parent=11 // pred_check_branch
        %211 = sbr.rel (%p209) target = $region20
      $region19: #{tpu_custom_call.1} parent=11 // pred_region
        _
      $region20: #{tpu_custom_call.1} parent=11 // pred_fallthru
        _
      // Predicated region
      $region21: #{tpu_custom_call.1} parent=11 // pred_check
        %p212 = pneg %p102
      $region22: #{tpu_custom_call.1} parent=11 // pred_check_branch
        %214 = sbr.rel (%p212) target = $region24
      $region23: #{tpu_custom_call.1} parent=11 // pred_region
        _
      $region24: #{tpu_custom_call.1} parent=11 // pred_fallthru
        _
      // Predicated region
      $region25: #{tpu_custom_call.1} parent=11 // pred_check
        %p215 = pneg %p123
      $region26: #{tpu_custom_call.1} parent=11 // pred_check_branch
        %217 = sbr.rel (%p215) target = $region28
      $region27: #{tpu_custom_call.1} parent=11 // pred_region
        _
      $region28: #{tpu_custom_call.1} parent=11 // pred_fallthru
        _
      // Predicated region
      $region29: #{tpu_custom_call.1} parent=11 // pred_check
        %p218 = pneg %p144
      $region30: #{tpu_custom_call.1} parent=11 // pred_check_branch
        %220 = sbr.rel (%p218) target = $region32
      $region31: #{tpu_custom_call.1} parent=11 // pred_region
        _
      $region32: #{tpu_custom_call.1} parent=11 // pred_fallthru
        _
      // Predicated region
      $region33: #{tpu_custom_call.1} parent=11 // pred_check
        %p221 = pneg %p165
      $region34: #{tpu_custom_call.1} parent=11 // pred_check_branch
        %223 = sbr.rel (%p221) target = $region36
      $region35: #{tpu_custom_call.1} parent=11 // pred_region
        _
      $region36: #{tpu_custom_call.1} parent=11 // pred_fallthru
        _
    $region12: #{tpu_custom_call.1} parent=5 // pred_fallthru
      _
    %p224 = scmp.lt.s32.totalorder %s13, 2
    // Predicated region
    $region37: #{tpu_custom_call.1} parent=5 // pred_check
      %p225 = pneg %p224
    $region38: #{tpu_custom_call.1} parent=5 // pred_check_branch
      %227 = sbr.rel (%p225) target = $region40
    $region39: #{tpu_custom_call.1} parent=5 // pred_region
      // Predicated region
      $region41: #{tpu_custom_call.1} parent=39 // pred_check
        %p228 = pneg %p33
      $region42: #{tpu_custom_call.1} parent=39 // pred_check_branch
        %230 = sbr.rel (%p228) target = $region44
      $region43: #{tpu_custom_call.1} parent=39 // pred_region
        %s231 = smul.u32 2, %s13
        %p232 = scmp.lt.s32.totalorder %s231, 3
        %s233 = scalar_select %p232, %s231, 3
        %s234 = smul.addr %s233, 8
        %s235 = scalar_lea.vmem %s0, %s234
        %s236 = smul.u32 2, %s13
      $region44: #{tpu_custom_call.1} parent=39 // pred_fallthru
        _
    $region40: #{tpu_custom_call.1} parent=5 // pred_fallthru
      _
    %p237 = scmp.le.s32.totalorder 1, %s13
    %p238 = scmp.lt.s32.totalorder %s13, 3
    %p239 = pnand %p237, %p238
    %p240 = pneg %p239
    // Predicated region
    $region45: #{tpu_custom_call.1} parent=5 // pred_check
      _
    $region46: #{tpu_custom_call.1} parent=5 // pred_check_branch
      %242 = sbr.rel (%p239) target = $region48
    $region47: #{tpu_custom_call.1} parent=5 // pred_region
      %s243 = ssub.s32 %s13, 1
      %s244 = smul.u32 2, %s18
      %p245 = scmp.lt.s32.totalorder %s244, 3
      %s246 = scalar_select %p245, %s244, 3
      %s247 = smul.addr %s246, 8
      %s248 = scalar_lea.vmem %s0, %s247
      %p249 = pneg %p39
      %p250 = pneg %p36
      %p251 = pneg %p60
      %p252 = pneg %p57
      %p253 = pneg %p81
      %p254 = pneg %p78
      %p255 = pneg %p102
      %p256 = pneg %p99
      %p257 = pneg %p123
      %p258 = pneg %p120
      %p259 = pneg %p144
      %p260 = pneg %p141
      %p261 = pneg %p165
      %p262 = pneg %p162
      %p263 = pneg %p191
      %p264 = pneg %p188
      %s265 = smul.u32 2, %s18
      %p266 = scmp.lt.s32.totalorder %s265, 3
      %s267 = scalar_select %p266, %s265, 3
      %s268 = smul.addr %s267, 8
      %s269 = scalar_lea.vmem %s7, %s268
      %s270 = smul.u32 2, %s18
      %p271 = scmp.lt.s32.totalorder %s270, 3
      %s272 = scalar_select %p271, %s270, 3
      %s273 = smul.addr %s272, 8
      %s274 = scalar_lea.vmem %s0, %s273
      %s275 = smul.u32 2, %s18
      %s276 = smul.u32 2, %s18
      %p277 = scmp.lt.s32.totalorder %s276, 3
      %s278 = scalar_select %p277, %s276, 3
      %s279 = smul.addr %s278, 8
      %s280 = scalar_lea.vmem %s7, %s279
      %s281 = smul.u32 2, %s18
      %v283 = vld [vmem:[%s274] sm:$0xff]
      %v284 = vld [vmem:[%s274 + $0x8] sm:$0xff]
      %v285 = vpack.c.bf16 %v284, %v283
      %v286 = vld [vmem:[%s1] sm:$0xf]
      %v287 = vld [vmem:[%s1 + $0x4] sm:$0xf]
      %v288 = vld [vmem:[%s1 + $0x8] sm:$0xf]
      %v289 = vld [vmem:[%s2] sm:$0x1]
      %v291 = vperm.slane %v289, 0
      %v296 = vunpack.c.l.b16 %v286
      %v297 = vunpack.c.l.b16 %v287
      %v298 = vunpack.c.l.b16 %v288
      %v299 = vpack.c.b16 %v297, %v296
      %v300 = vpack.c.b16 %v298, %v298
      %vm302 = vcmask 195584
      %v304 = vsel %vm302, %v285, 0
      %vm306 = vcmask 1043456
      %v308 = vsel %vm306, %v300, 0
      %310 = vmatpush.bf16.msra.mxu0 0
      %311 = vmatpush.bf16.msra.mxu0 0
      %312 = vmatpush.bf16.msra.mxu0 0
      %313 = vmatpush.bf16.msra.mxu0 0
      %314 = vmatpush.bf16.msra.mxu0 0
      %315 = vmatpush.bf16.msra.mxu0 0
      %316 = vmatpush.bf16.msra.mxu0 %v308
      %317 = vmatpush.bf16.msra.mxu0 %v299
      %318 = vmatmul.bf16.gmra.mxu0 %v304
      %v319 = vpop.f32.mrf.mxu0
      %v320 = vadd.f32 %v291, %v319
      %v321 = vpop.f32.mrf.mxu0
      %v322 = vadd.f32 %v291, %v321
      %323 = vdwg.mxu0
      %v324 = vmax.f32 %v320, 0.0
      %v325 = vmax.f32 %v322, 0.0
      %v326 = vpack.c.bf16 %v325, %v324
      %v327 = vld [vmem:[%s3] sm:$0xf]
      %v328 = vld [vmem:[%s3 + $0x4] sm:$0xf]
      %v329 = vld [vmem:[%s3 + $0x8] sm:$0xf]
      %v330 = vld [vmem:[%s3 + $0xc] sm:$0xf]
      %v331 = vld [vmem:[%s3 + $0x10] sm:$0xf]
      %v332 = vld [vmem:[%s3 + $0x14] sm:$0xf]
      %v333 = vld [vmem:[%s3 + $0x18] sm:$0xf]
      %v334 = vld [vmem:[%s3 + $0x1c] sm:$0xf]
      %v335 = vld [vmem:[%s3 + $0x20] sm:$0xf]
      %v336 = vld [vmem:[%s3 + $0x24] sm:$0xf]
      %v337 = vld [vmem:[%s3 + $0x28] sm:$0xf]
      %v338 = vld [vmem:[%s3 + $0x2c] sm:$0xf]
      %v339 = vld [vmem:[%s3 + $0x30] sm:$0xf]
      %v340 = vld [vmem:[%s3 + $0x34] sm:$0xf]
      %v341 = vld [vmem:[%s3 + $0x38] sm:$0xf]
      %v342 = vld [vmem:[%s3 + $0x3c] sm:$0xf]
      %v343 = vld [vmem:[%s4] sm:$0x1]
      %v345 = vperm.slane %v343, 0
      %v363 = vunpack.c.l.b16 %v327
      %v364 = vunpack.c.l.b16 %v328
      %v365 = vunpack.c.l.b16 %v329
      %v366 = vunpack.c.l.b16 %v330
      %v367 = vunpack.c.l.b16 %v331
      %v368 = vunpack.c.l.b16 %v332
      %v369 = vunpack.c.l.b16 %v333
      %v370 = vunpack.c.l.b16 %v334
      %v371 = vunpack.c.l.b16 %v335
      %v372 = vunpack.c.l.b16 %v336
      %v373 = vunpack.c.l.b16 %v337
      %v374 = vunpack.c.l.b16 %v338
      %v375 = vunpack.c.l.b16 %v339
      %v376 = vunpack.c.l.b16 %v340
      %v377 = vunpack.c.l.b16 %v341
      %v378 = vunpack.c.l.b16 %v342
      %v379 = vpack.c.b16 %v364, %v363
      %v380 = vpack.c.b16 %v366, %v365
      %v381 = vpack.c.b16 %v368, %v367
      %v382 = vpack.c.b16 %v370, %v369
      %v383 = vpack.c.b16 %v372, %v371
      %v384 = vpack.c.b16 %v374, %v373
      %v385 = vpack.c.b16 %v376, %v375
      %v386 = vpack.c.b16 %v378, %v377
      %395 = vmatpush.bf16.msra.mxu0 %v386
      %396 = vmatpush.bf16.msra.mxu0 %v385
      %397 = vmatpush.bf16.msra.mxu0 %v384
      %398 = vmatpush.bf16.msra.mxu0 %v383
      %399 = vmatpush.bf16.msra.mxu0 %v382
      %400 = vmatpush.bf16.msra.mxu0 %v381
      %401 = vmatpush.bf16.msra.mxu0 %v380
      %402 = vmatpush.bf16.msra.mxu0 %v379
      %403 = vmatmul.bf16.gmra.mxu0 %v326
      %v404 = vpop.f32.mrf.mxu0
      %v405 = vadd.f32 %v345, %v404
      %v406 = vpop.f32.mrf.mxu0
      %v407 = vadd.f32 %v345, %v406
      %408 = vdwg.mxu0
      %v409 = vmax.f32 %v405, 0.0
      %v410 = vmax.f32 %v407, 0.0
      %v411 = vpack.c.bf16 %v410, %v409
      %v412 = vld [vmem:[%s5] sm:$0xf]
      %v413 = vld [vmem:[%s5 + $0x4] sm:$0xf]
      %v414 = vld [vmem:[%s5 + $0x8] sm:$0xf]
      %v415 = vld [vmem:[%s5 + $0xc] sm:$0xf]
      %v416 = vld [vmem:[%s5 + $0x10] sm:$0xf]
      %v417 = vld [vmem:[%s5 + $0x14] sm:$0xf]
      %v418 = vld [vmem:[%s5 + $0x18] sm:$0xf]
      %v419 = vld [vmem:[%s5 + $0x1c] sm:$0xf]
      %v420 = vld [vmem:[%s5 + $0x20] sm:$0xf]
      %v421 = vld [vmem:[%s5 + $0x24] sm:$0xf]
      %v422 = vld [vmem:[%s5 + $0x28] sm:$0xf]
      %v423 = vld [vmem:[%s5 + $0x2c] sm:$0xf]
      %v424 = vld [vmem:[%s5 + $0x30] sm:$0xf]
      %v425 = vld [vmem:[%s5 + $0x34] sm:$0xf]
      %v426 = vld [vmem:[%s5 + $0x38] sm:$0xf]
      %v427 = vld [vmem:[%s5 + $0x3c] sm:$0xf]
      %v428 = vld [vmem:[%s6] sm:$0x1]
      %v430 = vperm.slane %v428, 0
      %v448 = vunpack.c.l.b16 %v412
      %v449 = vunpack.c.l.b16 %v413
      %v450 = vunpack.c.l.b16 %v414
      %v451 = vunpack.c.l.b16 %v415
      %v452 = vunpack.c.l.b16 %v416
      %v453 = vunpack.c.l.b16 %v417
      %v454 = vunpack.c.l.b16 %v418
      %v455 = vunpack.c.l.b16 %v419
      %v456 = vunpack.c.l.b16 %v420
      %v457 = vunpack.c.l.b16 %v421
      %v458 = vunpack.c.l.b16 %v422
      %v459 = vunpack.c.l.b16 %v423
      %v460 = vunpack.c.l.b16 %v424
      %v461 = vunpack.c.l.b16 %v425
      %v462 = vunpack.c.l.b16 %v426
      %v463 = vunpack.c.l.b16 %v427
      %v464 = vpack.c.b16 %v449, %v448
      %v465 = vpack.c.b16 %v451, %v450
      %v466 = vpack.c.b16 %v453, %v452
      %v467 = vpack.c.b16 %v455, %v454
      %v468 = vpack.c.b16 %v457, %v456
      %v469 = vpack.c.b16 %v459, %v458
      %v470 = vpack.c.b16 %v461, %v460
      %v471 = vpack.c.b16 %v463, %v462
      %480 = vmatpush.bf16.msra.mxu0 %v471
      %481 = vmatpush.bf16.msra.mxu0 %v470
      %482 = vmatpush.bf16.msra.mxu0 %v469
      %483 = vmatpush.bf16.msra.mxu0 %v468
      %484 = vmatpush.bf16.msra.mxu0 %v467
      %485 = vmatpush.bf16.msra.mxu0 %v466
      %486 = vmatpush.bf16.msra.mxu0 %v465
      %487 = vmatpush.bf16.msra.mxu0 %v464
      %488 = vmatmul.bf16.gmra.mxu0 %v411
      %v489 = vpop.f32.mrf.mxu0
      %v490 = vadd.f32 %v430, %v489
      %v491 = vpop.f32.mrf.mxu0
      %v492 = vadd.f32 %v430, %v491
      %493 = vdwg.mxu0
      %vm494 = vcmask 97280
      %495 = vst.msk [vmem:[%s280] sm:$0xff] %vm494, %v490
      %496 = vst.msk [vmem:[%s280 + $0x8] sm:$0xff] %vm494, %v492
      %s497 = smul.u32 2, %s18
      %p498 = scmp.lt.s32.totalorder %s497, 3
      %s499 = scalar_select %p498, %s497, 3
      %s500 = smul.addr %s499, 8
      %s501 = scalar_lea.vmem %s7, %s500
      // Predicated region
      $region49: #{tpu_custom_call.1} parent=47 // pred_check
        %p502 = pneg %p188
      $region50: #{tpu_custom_call.1} parent=47 // pred_check_branch
        %504 = sbr.rel (%p502) target = $region52
      $region51: #{tpu_custom_call.1} parent=47 // pred_region
        %s505 = smul.u32 2, %s18
      $region52: #{tpu_custom_call.1} parent=47 // pred_fallthru
        _
    $region48: #{tpu_custom_call.1} parent=5 // pred_fallthru
      _
    %p506 = scmp.le.s32.totalorder 2, %s13
    // Predicated region
    $region53: #{tpu_custom_call.1} parent=5 // pred_check
      %p507 = pneg %p506
    $region54: #{tpu_custom_call.1} parent=5 // pred_check_branch
      %509 = sbr.rel (%p507) target = $region56
    $region55: #{tpu_custom_call.1} parent=5 // pred_region
      %s510 = ssub.s32 %s13, 2
      // Predicated region
      $region57: #{tpu_custom_call.1} parent=55 // pred_check
        %p511 = pneg %p194
      $region58: #{tpu_custom_call.1} parent=55 // pred_check_branch
        %513 = sbr.rel (%p511) target = $region60
      $region59: #{tpu_custom_call.1} parent=55 // pred_region
        %s514 = smul.u32 2, %s19
        %p515 = scmp.lt.s32.totalorder %s514, 3
        %s516 = scalar_select %p515, %s514, 3
        %s517 = smul.addr %s516, 8
        %s518 = scalar_lea.vmem %s7, %s517
      $region60: #{tpu_custom_call.1} parent=55 // pred_fallthru
        _
    $region56: #{tpu_custom_call.1} parent=5 // pred_fallthru
      _
  $region6: #{tpu_custom_call.1} parent=0 // loop_footer
    %s17 = sadd.s32 1, %s13
  $region7: #{tpu_custom_call.1} parent=0 // loop_footer_branch
    %12 = sbr.rel target = $region3
  $region8: #{tpu_custom_call.1} parent=0 // loop_exit
    _

</llo_original>
